<compile_context>
chip_gen: v7x
topology: tpu7x:2x2x1
jax: 0.10.0
libtpu: 0.0.40
codegen_flags: <defaults>
</compile_context>

<pallas_src>
import functools

import jax
import jax.numpy as jnp
from jax.experimental import pallas as pl
from jax.experimental.pallas import tpu as pltpu


def _round_up(x, m):
    return (x + m - 1) // m * m


def transition_kernel(x_ref, scale_ref, bias_ref, w_ref, o_ref):
    # x_ref:     (TP, K)        rows = pooled output pixels, K = 4*Cin (2x2 taps packed)
    # scale_ref: (1,  K)  f32   folded BN scale (tiled over the 4 pool taps)
    # bias_ref:  (1,  K)  f32   folded BN bias
    # w_ref:     (K, Cout_pad)  0.25 * tiled 1x1-conv weight (avgpool folded), zero-padded
    # o_ref:     (TP, Cout_pad) out_dtype
    x = x_ref[...].astype(jnp.float32)
    # BN + ReLU in f32 (safe on v5e's non-bf16 VPU, accuracy-friendly; hidden under DMA).
    y = jnp.maximum(x * scale_ref[...] + bias_ref[...], 0.0)
    o_ref[...] = jnp.dot(
        y.astype(w_ref.dtype), w_ref[...], preferred_element_type=jnp.float32
    ).astype(o_ref.dtype)


def _vmem_budgets():
    # Generation-aware VMEM budgeting: v7x has 64 MiB per TensorCore, v5e/v6e have 128 MiB.
    try:
        vmem_cap = pltpu.get_tpu_info().vmem_capacity_bytes
    except Exception:
        vmem_cap = None
    if vmem_cap is not None and vmem_cap <= 96 * 1024 * 1024:
        return 18 * 1024 * 1024, 36 * 1024 * 1024     # v7x: budget, scoped limit
    return 24 * 1024 * 1024, 48 * 1024 * 1024         # v5e / v6e


def _pick_row_tile(n_rows, k, cout_pad, *, in_bytes, out_bytes, w_bytes,
                   budget_bytes, min_blocks):
    # Per-step VMEM model (matches the actual dtypes):
    #   grid-invariant operands (weight + scale + bias) are double-buffered by the default
    #   pipeline (TODO(synk): pipeline_mode=pl.Buffered(1) on them would reclaim one copy),
    #   input rows double-buffered at in_bytes, one f32 BN temp + one matmul-dtype temp,
    #   output rows double-buffered at out_bytes.
    fixed = 2 * (k * cout_pad * w_bytes) + 2 * (2 * k * 4)
    per_row = 2 * k * in_bytes + k * 4 + k * w_bytes + 2 * cout_pad * out_bytes
    tp = (budget_bytes - fixed) // max(per_row, 1)
    tp = int(max(16, min(4096, tp)))
    # Keep >= min_blocks grid steps so the "parallel" axis can shard across v7x's 2 TCs.
    if min_blocks > 1:
        tp = min(tp, max(16, n_rows // min_blocks))
    # MXU-friendly rounding: large tiles snap to 256, small ones to 16 (bf16 sublane pack).
    tp = tp // 256 * 256 if tp >= 512 else tp // 16 * 16
    tp = max(16, tp)
    if n_rows <= tp:
        return n_rows  # single full-extent block is always a legal BlockSpec
    return tp


@functools.partial(
    jax.jit,
    static_argnames=("eps", "act_dtype", "matmul_dtype", "out_dtype", "channels_last"),
)
def transition_forward(x_nchw, gamma, beta, run_mean, run_var, conv_w, eps=1e-5,
                       act_dtype=jnp.bfloat16, matmul_dtype=jnp.bfloat16,
                       out_dtype=jnp.bfloat16, channels_last=False):
    N, C, H, W = x_nchw.shape
    Cout = conv_w.shape[0]
    # PyTorch AvgPool2d(2,2) floors odd spatial dims; that case is not supported here.
    assert H % 2 == 0 and W % 2 == 0, "H and W must be even"
    Ho, Wo = H // 2, W // 2
    P = Ho * Wo
    NP = N * P
    K = 4 * C
    Cout_pad = _round_up(Cout, 128)  # lane-dense output stores (128-wide, right for all gens)

    # Fold eval-mode BatchNorm into per-channel scale/bias (kept f32 for accuracy).
    scale = gamma / jnp.sqrt(run_var + eps)
    bias = beta - run_mean * scale

    # Repack NCHW -> (N*P, 4*C): one row per pooled output pixel, K packs the 2x2 taps.
    # Cast to act_dtype (bf16) first so the (possibly materialised) layout copy already
    # moves half the bytes; allow_input_fusion below lets XLA fuse this chain into the
    # kernel's input DMA where possible.
    x = jnp.transpose(x_nchw.astype(act_dtype), (0, 2, 3, 1))   # NHWC
    x = x.reshape(N, Ho, 2, Wo, 2, C)
    x = jnp.transpose(x, (0, 1, 3, 2, 4, 5))                    # (N, Ho, Wo, th, tw, C)
    x = x.reshape(NP, K)
    # TODO(synk): if xprof shows this repack still materialises, switch to 4 per-tap
    # BlockSpecs over the free (N, Ho, 2, Wo, 2, C) view and do 4 accumulating dots.

    scale_big = jnp.tile(scale, 4).reshape(1, K).astype(jnp.float32)
    bias_big = jnp.tile(bias, 4).reshape(1, K).astype(jnp.float32)

    # 1x1-conv weight with the 2x2 average pool folded in (x4 tile, x0.25),
    # zero-padded to a lane-dense Cout, stored in matmul_dtype (bf16 for the MXU).
    w2 = conv_w.reshape(Cout, C).T                 # (C, Cout)
    w_big = 0.25 * jnp.tile(w2, (4, 1))            # (K, Cout)
    w_big = jnp.pad(w_big, ((0, 0), (0, Cout_pad - Cout))).astype(matmul_dtype)

    in_bytes = jnp.dtype(act_dtype).itemsize
    out_bytes = jnp.dtype(out_dtype).itemsize
    w_bytes = jnp.dtype(matmul_dtype).itemsize

    budget_bytes, vmem_limit = _vmem_budgets()
    min_blocks = 4 if NP >= 2048 else (2 if NP >= 32 else 1)
    TP = _pick_row_tile(NP, K, Cout_pad, in_bytes=in_bytes, out_bytes=out_bytes,
                        w_bytes=w_bytes, budget_bytes=budget_bytes, min_blocks=min_blocks)
    grid = (pl.cdiv(NP, TP),)

    cost = pl.CostEstimate(
        flops=2 * NP * K * Cout_pad,
        transcendentals=0,
        bytes_accessed=(NP * K * in_bytes + NP * Cout_pad * out_bytes
                        + K * Cout_pad * w_bytes + 2 * K * 4),
    )

    out = pl.pallas_call(
        transition_kernel,
        out_shape=jax.ShapeDtypeStruct((NP, Cout_pad), out_dtype),
        grid=grid,
        in_specs=[
            pl.BlockSpec((TP, K), lambda i: (i, 0)),
            pl.BlockSpec((1, K), lambda i: (0, 0)),
            pl.BlockSpec((1, K), lambda i: (0, 0)),
            pl.BlockSpec((K, Cout_pad), lambda i: (0, 0)),
        ],
        out_specs=pl.BlockSpec((TP, Cout_pad), lambda i: (i, 0)),
        compiler_params=pltpu.CompilerParams(
            dimension_semantics=("parallel",),          # no reduction axis -> shard across TCs
            vmem_limit_bytes=vmem_limit,
            allow_input_fusion=[True, False, False, False],
        ),
        cost_estimate=cost,
    )(x, scale_big, bias_big, w_big)

    out = out[:, :Cout].reshape(N, Ho, Wo, Cout)
    if channels_last:
        return out  # skip the layout round-trip when the consumer accepts NHWC
    # NHWC -> NCHW in out_dtype (bf16 by default -> half the transpose traffic).
    # TODO(synk): drop this entirely once downstream DenseNet blocks consume channels-last.
    return jnp.transpose(out, (0, 3, 1, 2))


def transition_reference(x, gamma, beta, run_mean, run_var, conv_w, eps=1e-5):
    # Pure-JAX reference mirroring the PyTorch module (eval-mode BN).
    xb = (x - run_mean[None, :, None, None]) / jnp.sqrt(run_var[None, :, None, None] + eps)
    xb = xb * gamma[None, :, None, None] + beta[None, :, None, None]
    xr = jnp.maximum(xb, 0.0)
    Cout, Cin = conv_w.shape[0], conv_w.shape[1]
    y = jnp.einsum("nchw,oc->nohw", xr, conv_w.reshape(Cout, Cin))
    N, O, H, W = y.shape
    return y.reshape(N, O, H // 2, 2, W // 2, 2).mean(axis=(3, 5))


if __name__ == "__main__":
    key = jax.random.PRNGKey(0)
    k_x, k_g, k_b, k_m, k_v, k_w = jax.random.split(key, 6)

    N, Cin, H, W = 2, 4, 16, 16
    Cout = Cin // 2  # DenseNet transition typically halves channels

    x = jax.random.normal(k_x, (N, Cin, H, W), dtype=jnp.float32)
    gamma = jax.random.normal(k_g, (Cin,), dtype=jnp.float32) * 0.1 + 1.0
    beta = jax.random.normal(k_b, (Cin,), dtype=jnp.float32) * 0.1
    run_mean = jax.random.normal(k_m, (Cin,), dtype=jnp.float32) * 0.1
    run_var = jax.random.uniform(k_v, (Cin,), dtype=jnp.float32, minval=0.5, maxval=1.5)
    conv_w = jax.random.normal(k_w, (Cout, Cin, 1, 1), dtype=jnp.float32) * 0.2

    ref = transition_reference(x, gamma, beta, run_mean, run_var, conv_w)

    # Primary (performance) path: bf16 activations / weight / output, f32 accumulation.
    out = transition_forward(x, gamma, beta, run_mean, run_var, conv_w)
    out = jax.block_until_ready(out)
    assert out.shape == (N, Cout, H // 2, W // 2), out.shape
    assert out.dtype == jnp.bfloat16, out.dtype
    out_f = out.astype(jnp.float32)
    assert jnp.allclose(out_f, ref, atol=7.5e-2, rtol=7.5e-2), float(jnp.max(jnp.abs(out_f - ref)))

    # Exactness check: same kernel on an all-f32 path matches the reference tightly.
    out_f32 = transition_forward(x, gamma, beta, run_mean, run_var, conv_w,
                                 act_dtype=jnp.float32, matmul_dtype=jnp.float32,
                                 out_dtype=jnp.float32)
    out_f32 = jax.block_until_ready(out_f32)
    assert jnp.allclose(out_f32, ref, atol=1e-5, rtol=1e-5), float(jnp.max(jnp.abs(out_f32 - ref)))

    print("KERNEL_OK")
</pallas_src>

<mosaic_0001>
module attributes {stable_mosaic.version = 11 : i64} {
  func.func @transition_kernel(%arg0: i32, %arg1: memref<64x16xbf16, #tpu.memory_space<vmem>>, %arg2: memref<1x16xf32, #tpu.memory_space<vmem>>, %arg3: memref<1x16xf32, #tpu.memory_space<vmem>>, %arg4: memref<16x128xbf16, #tpu.memory_space<vmem>>, %arg5: memref<64x128xbf16, #tpu.memory_space<vmem>>) attributes {dimension_semantics = [#tpu.dimension_semantics<parallel>], iteration_bounds = array<i64: 2>, scalar_prefetch = 0 : i64, scratch_operands = 0 : i64, tpu.core_type = #tpu.core_type<tc>, window_params = [{transform_indices = @transform_0, window_bounds = array<i64: 64, 16>}, {pipeline_mode = #tpu.pipeline_mode<synchronous>, transform_indices = @transform_1, window_bounds = array<i64: 1, 16>}, {pipeline_mode = #tpu.pipeline_mode<synchronous>, transform_indices = @transform_2, window_bounds = array<i64: 1, 16>}, {pipeline_mode = #tpu.pipeline_mode<synchronous>, transform_indices = @transform_3, window_bounds = array<i64: 16, 128>}, {transform_indices = @transform_4, window_bounds = array<i64: 64, 128>}]} {
    %c0 = arith.constant 0 : index
    %c0_0 = arith.constant 0 : index
    %0 = vector.load %arg1[%c0, %c0_0] : memref<64x16xbf16, #tpu.memory_space<vmem>>, vector<64x16xbf16>
    %1 = arith.extf %0 : vector<64x16xbf16> to vector<64x16xf32>
    %c0_1 = arith.constant 0 : index
    %c0_2 = arith.constant 0 : index
    %2 = vector.load %arg2[%c0_1, %c0_2] : memref<1x16xf32, #tpu.memory_space<vmem>>, vector<1x16xf32>
    %3 = vector.broadcast %2 : vector<1x16xf32> to vector<64x16xf32>
    %4 = arith.mulf %1, %3 : vector<64x16xf32>
    %c0_3 = arith.constant 0 : index
    %c0_4 = arith.constant 0 : index
    %5 = vector.load %arg3[%c0_3, %c0_4] : memref<1x16xf32, #tpu.memory_space<vmem>>, vector<1x16xf32>
    %6 = vector.broadcast %5 : vector<1x16xf32> to vector<64x16xf32>
    %7 = arith.addf %4, %6 : vector<64x16xf32>
    %cst = arith.constant 0.000000e+00 : f32
    %8 = vector.broadcast %cst : f32 to vector<64x16xf32>
    %9 = arith.maximumf %7, %8 : vector<64x16xf32>
    %10 = arith.truncf %9 : vector<64x16xf32> to vector<64x16xbf16>
    %c0_5 = arith.constant 0 : index
    %c0_6 = arith.constant 0 : index
    %11 = vector.load %arg4[%c0_5, %c0_6] : memref<16x128xbf16, #tpu.memory_space<vmem>>, vector<16x128xbf16>
    %cst_7 = arith.constant dense<0.000000e+00> : vector<64x128xf32>
    %12 = tpu.matmul %10, %11, %cst_7 {dimension_numbers = #tpu.dot_dimension_numbers<[1], [0], [0], [1], [0, 0, 1, 1], [], []>} : vector<64x16xbf16>, vector<16x128xbf16>, vector<64x128xf32> -> vector<64x128xf32>
    %13 = arith.truncf %12 : vector<64x128xf32> to vector<64x128xbf16>
    %c0_8 = arith.constant 0 : index
    %c0_9 = arith.constant 0 : index
    %14 = vector.load %arg5[%c0_8, %c0_9] : memref<64x128xbf16, #tpu.memory_space<vmem>>, vector<64x128xbf16>
    tpu.vector_store %arg5[%c0_8, %c0_9], %13 {strides = array<i32>} : memref<64x128xbf16, #tpu.memory_space<vmem>>, vector<64x128xbf16>,
    return
  }
  func.func @transform_0(%arg0: i32) -> (i32, i32) {
    %c0_i32 = arith.constant 0 : i32
    %c0_i32_0 = arith.constant 0 : i32
    return %arg0, %c0_i32 : i32, i32
  }
  func.func @transform_1(%arg0: i32) -> (i32, i32) {
    %c0_i32 = arith.constant 0 : i32
    %c0_i32_0 = arith.constant 0 : i32
    %c0_i32_1 = arith.constant 0 : i32
    return %c0_i32, %c0_i32_0 : i32, i32
  }
  func.func @transform_2(%arg0: i32) -> (i32, i32) {
    %c0_i32 = arith.constant 0 : i32
    %c0_i32_0 = arith.constant 0 : i32
    %c0_i32_1 = arith.constant 0 : i32
    return %c0_i32, %c0_i32_0 : i32, i32
  }
  func.func @transform_3(%arg0: i32) -> (i32, i32) {
    %c0_i32 = arith.constant 0 : i32
    %c0_i32_0 = arith.constant 0 : i32
    %c0_i32_1 = arith.constant 0 : i32
    return %c0_i32, %c0_i32_0 : i32, i32
  }
  func.func @transform_4(%arg0: i32) -> (i32, i32) {
    %c0_i32 = arith.constant 0 : i32
    %c0_i32_0 = arith.constant 0 : i32
    return %arg0, %c0_i32 : i32, i32
  }
}

</mosaic_0001>

<llo_original>
// kernel: tile.18
$region0: #{tile.18}
  #allocation0 [shape = 's32[1]{0}', space=sflag, size = 0x4, scoped, tag = 'scoped memory for tile.18']
  %s0 = inlined_call_operand.vmem [shape: f32[4], index: 0, kind: input, shape index: {}]
  %s1 = inlined_call_operand.vmem [shape: f32[4,4], index: 1, kind: output, shape index: {}]
  // Predicated region
  $region2: #{tile.18} parent=0 // pred_check
    _
  $region3: #{tile.18} parent=0 // pred_check_branch
    %3 = sbr.rel (0) target = $region5
  $region4: #{tile.18} parent=0 // pred_region
    _
  $region5: #{tile.18} parent=0 // pred_fallthru
    _
  %v4 = vld [vmem:[%s0] ss:$0 sm:$0xff]
  %5 = vst [vmem:[%s1] sm:$0xf] %v4

// kernel: tile.19
$region0: #{tile.19}
  %s0 = inlined_call_operand.vmem [shape: f32[4,4], index: 0, kind: input, shape index: {}]
  %s1 = inlined_call_operand.vmem [shape: f32[1,16], index: 1, kind: output, shape index: {}]
  $region1: #{tile.19} parent=0
    #allocation0 [shape = 'u8[4096]{0}', space=vmem, size = 0x1000, scoped, tag = 'scoped mem for output reshape']
    #allocation1 [shape = 'u8[4096]{0}', space=vmem, size = 0x1000, scoped, tag = 'scoped mem for input reshape']
    %s3 = sshllo.u32 0, 4
    %v4 = vld [vmem:[%s0] sm:%s3]
    %5 = vst [vmem:[#allocation1] sm:%s3] %v4
    %v6 = vld [vmem:[#allocation1] sm:$0x1]
    %vm7 = vcmask 31744
    %8 = vst.msk [vmem:[#allocation0] sm:$0x1] %vm7, %v6
    %s9 = scalar_lea.vmem [#allocation1], 3
    %v10 = vld [vmem:[%s9] sm:$0x1]
    %11 = vrot.lane.b32.xlu0 %v10, 12
    %v12 = vpop.permute.xlu0 %11
    %vm13 = vcmask 130144
    %14 = vst.msk [vmem:[#allocation0] sm:$0x1] %vm13, %v12
    %s15 = scalar_lea.vmem [#allocation1], 2
    %v16 = vld [vmem:[%s15] sm:$0x1]
    %17 = vrot.lane.b32.xlu0 %v16, 8
    %v18 = vpop.permute.xlu0 %17
    %vm19 = vcmask 97344
    %20 = vst.msk [vmem:[#allocation0] sm:$0x1] %vm19, %v18
    %s21 = scalar_lea.vmem [#allocation1], 1
    %v22 = vld [vmem:[%s21] sm:$0x1]
    %23 = vrot.lane.b32.xlu0 %v22, 4
    %v24 = vpop.permute.xlu0 %23
    %vm25 = vcmask 64544
    %26 = vst.msk [vmem:[#allocation0] sm:$0x1] %vm25, %v24
    %s28 = sshllo.u32 0, 1
    %v30 = vld [vmem:[#allocation0] sm:%s28]
    %s31 = sshllo.u32 0, 1
    %32 = vst [vmem:[%s1] sm:%s31] %v30

// kernel: transition_forward.1
$region0: #{transition_forward.1}
  #allocation0 [shape = 'u32[]', space=smem, size = 0x4, offset = 0x4, fixed_abs, tag = 'smem constant byte address 0x4 - core index']
  #allocation1 [shape = 'u32[144,128]{1,0:T(1,128)}', space=vmem, size = 0x12000, scoped, tag = 'internal scratch']
  %s0 = inlined_call_operand.vmem [shape: bf16[128,16], index: 0, kind: input, shape index: {}]
  %s1 = inlined_call_operand.vmem [shape: f32[1,16], index: 1, kind: input, shape index: {}]
  %s2 = inlined_call_operand.vmem [shape: f32[1,16], index: 2, kind: input, shape index: {}]
  %s3 = inlined_call_operand.vmem [shape: bf16[16,128], index: 3, kind: input, shape index: {}]
  %s4 = inlined_call_operand.vmem [shape: bf16[128,128], index: 4, kind: output, shape index: {}]
  %s5 = sld [smem:[#allocation0]]
  $region49: #{transition_forward.1} parent=0
    _
  %s7 = ssub.s32 1, %s5
  %s8 = scalar_select 0, %s7, %s5
  loop: start=0, step=1, limit=4
  $region2: #{transition_forward.1} parent=0 // loop_pre_header
    _
  $region3: #{transition_forward.1} parent=0 // loop_header
    %s10 = sphi 0, %s14
    %p11 = scmp.ge.s32.totalorder %s10, 4
    %s20 = sphi 0, %s22
    %s23 = sphi 0, %s20
    %s24 = sphi 0, %s23
    %s40 = sphi 0, %s24
    %s44 = sphi 0, %s44
    %s46 = sphi 0, %s44
    %s47 = sphi 0, %s46
    %s61 = sphi 0, %s47
    %s65 = sphi 0, %s65
    %s67 = sphi 0, %s65
    %s68 = sphi 0, %s67
    %s82 = sphi 0, %s68
    %s86 = sphi 0, %s86
    %s88 = sphi 0, %s86
    %s89 = sphi 0, %s88
    %s103 = sphi 0, %s89
    %s109 = sphi 0, %s111
    %s112 = sphi 0, %s109
    %s113 = sphi 0, %s112
    %s129 = sphi 0, %s113
  $region4: #{transition_forward.1} parent=0 // loop_header_branch
    %13 = sbr.rel (%p11) target = $region8
  $region5: #{transition_forward.1} parent=0 // loop_body
    %s15 = ssub.s32 %s10, 1
    %s16 = ssub.s32 %s10, 2
    %s17 = sadd.s32 %s10, 1
    %s18 = ssub.s32 %s10, %s17
    %p19 = scmp.eq.s32.totalorder %s18, 0
    %s21 = sadd.s32 %s20, 1
    %s22 = scalar_select %p19, %s20, %s21
    %p25 = pneg %p19
    %p26 = scmp.eq.s32.totalorder %s10, 1
    %p27 = por %p25, %p26
    %p28 = scmp.ne.s32.totalorder %s20, %s23
    %p29 = scmp.eq.s32.totalorder %s10, 0
    %p30 = por %p28, %p29
    %p31 = scmp.ne.s32.totalorder %s20, %s23
    %p32 = scmp.eq.s32.totalorder %s15, 1
    %p33 = por %p31, %p32
    %p34 = scmp.ne.s32.totalorder %s23, %s24
    %p35 = scmp.eq.s32.totalorder %s15, 0
    %p36 = por %p34, %p35
    %p37 = scmp.ne.s32.totalorder %s23, %s24
    %p38 = scmp.eq.s32.totalorder %s16, 1
    %p39 = por %p37, %p38
    %p41 = scmp.ne.s32.totalorder %s24, %s40
    %p42 = scmp.eq.s32.totalorder %s16, 0
    %p43 = por %p41, %p42
    %s45 = sadd.s32 %s44, 1
    %p48 = scmp.eq.s32.totalorder %s10, 1
    %p49 = scmp.ne.s32.totalorder %s44, %s46
    %p50 = scmp.eq.s32.totalorder %s10, 0
    %p51 = por %p49, %p50
    %p52 = scmp.ne.s32.totalorder %s44, %s46
    %p53 = scmp.eq.s32.totalorder %s15, 1
    %p54 = por %p52, %p53
    %p55 = scmp.ne.s32.totalorder %s46, %s47
    %p56 = scmp.eq.s32.totalorder %s15, 0
    %p57 = por %p55, %p56
    %p58 = scmp.ne.s32.totalorder %s46, %s47
    %p59 = scmp.eq.s32.totalorder %s16, 1
    %p60 = por %p58, %p59
    %p62 = scmp.ne.s32.totalorder %s47, %s61
    %p63 = scmp.eq.s32.totalorder %s16, 0
    %p64 = por %p62, %p63
    %s66 = sadd.s32 %s65, 1
    %p69 = scmp.eq.s32.totalorder %s10, 1
    %p70 = scmp.ne.s32.totalorder %s65, %s67
    %p71 = scmp.eq.s32.totalorder %s10, 0
    %p72 = por %p70, %p71
    %p73 = scmp.ne.s32.totalorder %s65, %s67
    %p74 = scmp.eq.s32.totalorder %s15, 1
    %p75 = por %p73, %p74
    %p76 = scmp.ne.s32.totalorder %s67, %s68
    %p77 = scmp.eq.s32.totalorder %s15, 0
    %p78 = por %p76, %p77
    %p79 = scmp.ne.s32.totalorder %s67, %s68
    %p80 = scmp.eq.s32.totalorder %s16, 1
    %p81 = por %p79, %p80
    %p83 = scmp.ne.s32.totalorder %s68, %s82
    %p84 = scmp.eq.s32.totalorder %s16, 0
    %p85 = por %p83, %p84
    %s87 = sadd.s32 %s86, 1
    %p90 = scmp.eq.s32.totalorder %s10, 1
    %p91 = scmp.ne.s32.totalorder %s86, %s88
    %p92 = scmp.eq.s32.totalorder %s10, 0
    %p93 = por %p91, %p92
    %p94 = scmp.ne.s32.totalorder %s86, %s88
    %p95 = scmp.eq.s32.totalorder %s15, 1
    %p96 = por %p94, %p95
    %p97 = scmp.ne.s32.totalorder %s88, %s89
    %p98 = scmp.eq.s32.totalorder %s15, 0
    %p99 = por %p97, %p98
    %p100 = scmp.ne.s32.totalorder %s88, %s89
    %p101 = scmp.eq.s32.totalorder %s16, 1
    %p102 = por %p100, %p101
    %p104 = scmp.ne.s32.totalorder %s89, %s103
    %p105 = scmp.eq.s32.totalorder %s16, 0
    %p106 = por %p104, %p105
    %s107 = ssub.s32 %s10, %s17
    %p108 = scmp.eq.s32.totalorder %s107, 0
    %s110 = sadd.s32 %s109, 1
    %s111 = scalar_select %p108, %s109, %s110
    %p114 = pneg %p108
    %p115 = scmp.eq.s32.totalorder %s10, 1
    %p116 = por %p114, %p115
    %p117 = scmp.ne.s32.totalorder %s109, %s112
    %p118 = scmp.eq.s32.totalorder %s10, 0
    %p119 = por %p117, %p118
    %p120 = scmp.ne.s32.totalorder %s109, %s112
    %p121 = scmp.eq.s32.totalorder %s15, 1
    %p122 = por %p120, %p121
    %p123 = scmp.ne.s32.totalorder %s112, %s113
    %p124 = scmp.eq.s32.totalorder %s15, 0
    %p125 = por %p123, %p124
    %p126 = scmp.ne.s32.totalorder %s112, %s113
    %p127 = scmp.eq.s32.totalorder %s16, 1
    %p128 = por %p126, %p127
    %p130 = scmp.ne.s32.totalorder %s113, %s129
    %p131 = scmp.eq.s32.totalorder %s16, 0
    %p132 = por %p130, %p131
    %p133 = scmp.le.s32.totalorder 1, %s10
    %p134 = scmp.lt.s32.totalorder %s10, 3
    %p135 = pnand %p133, %p134
    %p136 = pneg %p135
    // Predicated region
    $region9: #{transition_forward.1} parent=5 // pred_check
      _
    $region10: #{transition_forward.1} parent=5 // pred_check_branch
      %138 = sbr.rel (%p135) target = $region12
    $region11: #{transition_forward.1} parent=5 // pred_region
      %s139 = ssub.s32 %s10, 1
      // Predicated region
      $region13: #{transition_forward.1} parent=11 // pred_check
        %p140 = pneg %p57
      $region14: #{transition_forward.1} parent=11 // pred_check_branch
        %142 = sbr.rel (%p140) target = $region16
      $region15: #{transition_forward.1} parent=11 // pred_region
        _
      $region16: #{transition_forward.1} parent=11 // pred_fallthru
        _
      // Predicated region
      $region17: #{transition_forward.1} parent=11 // pred_check
        %p143 = pneg %p78
      $region18: #{transition_forward.1} parent=11 // pred_check_branch
        %145 = sbr.rel (%p143) target = $region20
      $region19: #{transition_forward.1} parent=11 // pred_region
        _
      $region20: #{transition_forward.1} parent=11 // pred_fallthru
        _
      // Predicated region
      $region21: #{transition_forward.1} parent=11 // pred_check
        %p146 = pneg %p99
      $region22: #{transition_forward.1} parent=11 // pred_check_branch
        %148 = sbr.rel (%p146) target = $region24
      $region23: #{transition_forward.1} parent=11 // pred_region
        _
      $region24: #{transition_forward.1} parent=11 // pred_fallthru
        _
    $region12: #{transition_forward.1} parent=5 // pred_fallthru
      _
    %p149 = scmp.lt.s32.totalorder %s10, 2
    // Predicated region
    $region25: #{transition_forward.1} parent=5 // pred_check
      %p150 = pneg %p149
    $region26: #{transition_forward.1} parent=5 // pred_check_branch
      %152 = sbr.rel (%p150) target = $region28
    $region27: #{transition_forward.1} parent=5 // pred_region
      // Predicated region
      $region29: #{transition_forward.1} parent=27 // pred_check
        %p153 = pneg %p30
      $region30: #{transition_forward.1} parent=27 // pred_check_branch
        %155 = sbr.rel (%p153) target = $region32
      $region31: #{transition_forward.1} parent=27 // pred_region
        %s156 = smul.u32 8, %s10
        %p157 = scmp.lt.s32.totalorder %s156, 15
        %s158 = scalar_select %p157, %s156, 15
        %s159 = smul.addr %s158, 4
        %s160 = scalar_lea.vmem %s0, %s159
        %s161 = smul.u32 8, %s10
      $region32: #{transition_forward.1} parent=27 // pred_fallthru
        _
    $region28: #{transition_forward.1} parent=5 // pred_fallthru
      _
    %p162 = scmp.le.s32.totalorder 1, %s10
    %p163 = scmp.lt.s32.totalorder %s10, 3
    %p164 = pnand %p162, %p163
    %p165 = pneg %p164
    // Predicated region
    $region33: #{transition_forward.1} parent=5 // pred_check
      _
    $region34: #{transition_forward.1} parent=5 // pred_check_branch
      %167 = sbr.rel (%p164) target = $region36
    $region35: #{transition_forward.1} parent=5 // pred_region
      %s168 = ssub.s32 %s10, 1
      %s169 = smul.u32 8, %s15
      %p170 = scmp.lt.s32.totalorder %s169, 15
      %s171 = scalar_select %p170, %s169, 15
      %s172 = smul.addr %s171, 4
      %s173 = scalar_lea.vmem %s0, %s172
      %p174 = pneg %p36
      %p175 = pneg %p33
      %p176 = pneg %p57
      %p177 = pneg %p54
      %p178 = pneg %p78
      %p179 = pneg %p75
      %p180 = pneg %p99
      %p181 = pneg %p96
      %p182 = pneg %p125
      %p183 = pneg %p122
      %s184 = smul.u32 8, %s15
      %p185 = scmp.lt.s32.totalorder %s184, 15
      %s186 = scalar_select %p185, %s184, 15
      %s187 = smul.addr %s186, 4
      %s188 = scalar_lea.vmem %s4, %s187
      %s189 = smul.u32 8, %s15
      %p190 = scmp.lt.s32.totalorder %s189, 15
      %s191 = scalar_select %p190, %s189, 15
      %s192 = smul.addr %s191, 4
      %s193 = scalar_lea.vmem %s0, %s192
      %s194 = smul.u32 8, %s15
      %s195 = smul.u32 8, %s15
      %p196 = scmp.lt.s32.totalorder %s195, 15
      %s197 = scalar_select %p196, %s195, 15
      %s198 = smul.addr %s197, 4
      %s199 = scalar_lea.vmem %s4, %s198
      %s200 = smul.u32 8, %s15
      %v202 = vld [vmem:[%s193] sm:$0xf]
      %v203 = vld [vmem:[%s193 + $0x4] sm:$0xf]
      %v204 = vld [vmem:[%s193 + $0x8] sm:$0xf]
      %v205 = vld [vmem:[%s193 + $0xc] sm:$0xf]
      %v206 = vld [vmem:[%s193 + $0x10] sm:$0xf]
      %v207 = vld [vmem:[%s193 + $0x14] sm:$0xf]
      %v208 = vld [vmem:[%s193 + $0x18] sm:$0xf]
      %v209 = vld [vmem:[%s193 + $0x1c] sm:$0xf]
      %v210 = vunpack.c.l.bf16 %v202
      %v211 = vunpack.c.l.bf16 %v203
      %v212 = vunpack.c.l.bf16 %v204
      %v213 = vunpack.c.l.bf16 %v205
      %v214 = vunpack.c.l.bf16 %v206
      %v215 = vunpack.c.l.bf16 %v207
      %v216 = vunpack.c.l.bf16 %v208
      %v217 = vunpack.c.l.bf16 %v209
      %v218 = vld [vmem:[%s1] sm:$0x1]
      %v220 = vlaneseq
      %v221 = vshrl.u32 %v220, 7
      %v222 = vsub.s32 0, %v221
      %v223 = vrot.slane %v218, %v222
      %v225 = vmul.f32 %v210, %v223
      %v226 = vmul.f32 %v211, %v223
      %v227 = vmul.f32 %v212, %v223
      %v228 = vmul.f32 %v213, %v223
      %v229 = vmul.f32 %v214, %v223
      %v230 = vmul.f32 %v215, %v223
      %v231 = vmul.f32 %v216, %v223
      %v232 = vmul.f32 %v217, %v223
      %v233 = vld [vmem:[%s2] sm:$0x1]
      %v235 = vlaneseq
      %v236 = vshrl.u32 %v235, 7
      %v237 = vsub.s32 0, %v236
      %v238 = vrot.slane %v233, %v237
      %v240 = vadd.f32 %v225, %v238
      %v241 = vadd.f32 %v226, %v238
      %v242 = vadd.f32 %v227, %v238
      %v243 = vadd.f32 %v228, %v238
      %v244 = vadd.f32 %v229, %v238
      %v245 = vadd.f32 %v230, %v238
      %v246 = vadd.f32 %v231, %v238
      %v247 = vadd.f32 %v232, %v238
      %v248 = vmax.f32 %v240, 0.0
      %v249 = vmax.f32 %v241, 0.0
      %v250 = vmax.f32 %v242, 0.0
      %v251 = vmax.f32 %v243, 0.0
      %v252 = vmax.f32 %v244, 0.0
      %v253 = vmax.f32 %v245, 0.0
      %v254 = vmax.f32 %v246, 0.0
      %v255 = vmax.f32 %v247, 0.0
      %v256 = vpack.c.bf16 %v249, %v248
      %v257 = vpack.c.bf16 %v251, %v250
      %v258 = vpack.c.bf16 %v253, %v252
      %v259 = vpack.c.bf16 %v255, %v254
      %v260 = vld [vmem:[%s3] sm:$0xf]
      %v261 = vld [vmem:[%s3 + $0x4] sm:$0xf]
      %v264 = vunpack.c.l.b16 %v260
      %v265 = vunpack.c.l.b16 %v261
      %v266 = vpack.c.b16 %v265, %v264
      %vm268 = vcmask 130048
      %v270 = vsel %vm268, %v256, 0
      %v273 = vsel %vm268, %v257, 0
      %v276 = vsel %vm268, %v258, 0
      %v279 = vsel %vm268, %v259, 0
      %281 = vmatprep.subr.bf16.mxu0 0
      %282 = vmatpush1.bf16.msra.mxu0 %v266
      %283 = vmatprep.subr.bf16.mxu0 0
      %284 = vmatpush1.bf16.msra.mxu0 0
      %285 = vmatprep.subr.bf16.mxu0 0
      %286 = vmatpush1.bf16.msra.mxu0 0
      %287 = vmatprep.subr.bf16.mxu0 0
      %288 = vmatpush1.bf16.msra.mxu0 0
      %289 = vmatprep.subr.bf16.mxu0 0
      %290 = vmatpush1.bf16.msra.mxu0 0
      %291 = vmatprep.subr.bf16.mxu0 0
      %292 = vmatpush1.bf16.msra.mxu0 0
      %293 = vmatprep.subr.bf16.mxu0 0
      %294 = vmatpush1.bf16.msra.mxu0 0
      %295 = vmatprep.subr.bf16.mxu0 0
      %296 = vmatpush1.bf16.msra.mxu0 0
      %297 = vmatprep.subr.bf16.mxu0 0
      %298 = vmatpush1.bf16.msra.mxu0 0
      %299 = vmatprep.subr.bf16.mxu0 0
      %300 = vmatpush1.bf16.msra.mxu0 0
      %301 = vmatprep.subr.bf16.mxu0 0
      %302 = vmatpush1.bf16.msra.mxu0 0
      %303 = vmatprep.subr.bf16.mxu0 0
      %304 = vmatpush1.bf16.msra.mxu0 0
      %305 = vmatprep.subr.bf16.mxu0 0
      %306 = vmatpush1.bf16.msra.mxu0 0
      %307 = vmatprep.subr.bf16.mxu0 0
      %308 = vmatpush1.bf16.msra.mxu0 0
      %309 = vmatprep.subr.bf16.mxu0 0
      %310 = vmatpush1.bf16.msra.mxu0 0
      %311 = vmatprep.subr.bf16.mxu0 0
      %312 = vmatpush1.bf16.msra.mxu0 0
      %313 = vmatprep.mubr.bf16.mxu0 0
      %314 = vmatmul.mubr.bf16.gmra.mrb[0].mxu0 %v270
      %v315 = vpop.f32.mrb[0].mxu0
      %v316 = vadd.f32 0.0, %v315
      %v317 = vpop.f32.mrb[0].mxu0
      %v318 = vpop.f32.mrb[0].mxu0
      %v319 = vadd.f32 0.0, %v318
      %v320 = vpop.f32.mrb[0].mxu0
      %321 = vmatprep.mubr.bf16.mxu0 0
      %322 = vmatmul.mubr.bf16.gmra.mrb[0].mxu0 %v273
      %v323 = vpop.f32.mrb[0].mxu0
      %v324 = vadd.f32 0.0, %v323
      %v325 = vpop.f32.mrb[0].mxu0
      %v326 = vpop.f32.mrb[0].mxu0
      %v327 = vadd.f32 0.0, %v326
      %v328 = vpop.f32.mrb[0].mxu0
      %329 = vmatprep.mubr.bf16.mxu0 0
      %330 = vmatmul.mubr.bf16.gmra.mrb[0].mxu0 %v276
      %v331 = vpop.f32.mrb[0].mxu0
      %v332 = vadd.f32 0.0, %v331
      %v333 = vpop.f32.mrb[0].mxu0
      %v334 = vpop.f32.mrb[0].mxu0
      %v335 = vadd.f32 0.0, %v334
      %v336 = vpop.f32.mrb[0].mxu0
      %337 = vmatprep.mubr.bf16.mxu0 0
      %338 = vmatmul.mubr.bf16.gmra.mrb[0].mxu0 %v279
      %v339 = vpop.f32.mrb[0].mxu0
      %v340 = vadd.f32 0.0, %v339
      %v341 = vpop.f32.mrb[0].mxu0
      %v342 = vpop.f32.mrb[0].mxu0
      %v343 = vadd.f32 0.0, %v342
      %v344 = vpop.f32.mrb[0].mxu0
      %345 = vdwg.mxu0
      %v346 = vpack.c.bf16 %v319, %v316
      %v347 = vpack.c.bf16 %v327, %v324
      %v348 = vpack.c.bf16 %v335, %v332
      %v349 = vpack.c.bf16 %v343, %v340
      %v354 = vunpack.c.l.b16 %v346
      %v355 = vunpack.c.h.b16 %v346
      %v356 = vunpack.c.l.b16 %v347
      %v357 = vunpack.c.h.b16 %v347
      %v358 = vunpack.c.l.b16 %v348
      %v359 = vunpack.c.h.b16 %v348
      %v360 = vunpack.c.l.b16 %v349
      %v361 = vunpack.c.h.b16 %v349
      %v362 = vpack.c.b16 %v354, %v354
      %v363 = vpack.c.b16 %v355, %v355
      %v364 = vpack.c.b16 %v356, %v356
      %v365 = vpack.c.b16 %v357, %v357
      %v366 = vpack.c.b16 %v358, %v358
      %v367 = vpack.c.b16 %v359, %v359
      %v368 = vpack.c.b16 %v360, %v360
      %v369 = vpack.c.b16 %v361, %v361
      %378 = vst [vmem:[%s199] sm:$0xf] %v362
      %379 = vst [vmem:[%s199 + $0x4] sm:$0xf] %v363
      %380 = vst [vmem:[%s199 + $0x8] sm:$0xf] %v364
      %381 = vst [vmem:[%s199 + $0xc] sm:$0xf] %v365
      %382 = vst [vmem:[%s199 + $0x10] sm:$0xf] %v366
      %383 = vst [vmem:[%s199 + $0x14] sm:$0xf] %v367
      %384 = vst [vmem:[%s199 + $0x18] sm:$0xf] %v368
      %385 = vst [vmem:[%s199 + $0x1c] sm:$0xf] %v369
      %s386 = smul.u32 8, %s15
      %p387 = scmp.lt.s32.totalorder %s386, 15
      %s388 = scalar_select %p387, %s386, 15
      %s389 = smul.addr %s388, 4
      %s390 = scalar_lea.vmem %s4, %s389
      // Predicated region
      $region37: #{transition_forward.1} parent=35 // pred_check
        %p391 = pneg %p122
      $region38: #{transition_forward.1} parent=35 // pred_check_branch
        %393 = sbr.rel (%p391) target = $region40
      $region39: #{transition_forward.1} parent=35 // pred_region
        %s394 = smul.u32 8, %s15
      $region40: #{transition_forward.1} parent=35 // pred_fallthru
        _
    $region36: #{transition_forward.1} parent=5 // pred_fallthru
      _
    %p395 = scmp.le.s32.totalorder 2, %s10
    // Predicated region
    $region41: #{transition_forward.1} parent=5 // pred_check
      %p396 = pneg %p395
    $region42: #{transition_forward.1} parent=5 // pred_check_branch
      %398 = sbr.rel (%p396) target = $region44
    $region43: #{transition_forward.1} parent=5 // pred_region
      %s399 = ssub.s32 %s10, 2
      // Predicated region
      $region45: #{transition_forward.1} parent=43 // pred_check
        %p400 = pneg %p128
      $region46: #{transition_forward.1} parent=43 // pred_check_branch
        %402 = sbr.rel (%p400) target = $region48
      $region47: #{transition_forward.1} parent=43 // pred_region
        %s403 = smul.u32 8, %s16
        %p404 = scmp.lt.s32.totalorder %s403, 15
        %s405 = scalar_select %p404, %s403, 15
        %s406 = smul.addr %s405, 4
        %s407 = scalar_lea.vmem %s4, %s406
      $region48: #{transition_forward.1} parent=43 // pred_fallthru
        _
    $region44: #{transition_forward.1} parent=5 // pred_fallthru
      _
  $region6: #{transition_forward.1} parent=0 // loop_footer
    %s14 = sadd.s32 1, %s10
  $region7: #{transition_forward.1} parent=0 // loop_footer_branch
    %9 = sbr.rel target = $region3
  $region8: #{transition_forward.1} parent=0 // loop_exit
    _

</llo_original>
